<compile_context>
chip_gen: v6e
topology: v6e:2x2x1
jax: 0.10.0
libtpu: 0.0.40
codegen_flags: <defaults>
</compile_context>

<pallas_src>
import functools
import numpy as np
import jax
import jax.numpy as jnp
from jax.experimental import pallas as pl
from jax.experimental.pallas import tpu as pltpu


def _focal_kernel(x_ref, t_ref, out_ref, *, gamma, alpha, tl, l_total,
                  num_inner, needs_mask):
    jp = pl.program_id(1)
    jj = pl.program_id(2)

    # Zero the per-(sample, parallel-chunk) lane accumulator on the first
    # inner step (output block is resident across the jj axis).
    @pl.when(jj == 0)
    def _():
        out_ref[...] = jnp.zeros_like(out_ref)

    x = x_ref[0].astype(jnp.float32)      # (C, TL)  classes on sublanes
    t = t_ref[0].astype(jnp.int32)        # (1, TL)  lane-dense targets
    c = x.shape[0]

    # log_softmax over the class (sublane) axis.  Padded lanes of a partial
    # last tile stay in their own lane columns (per-lane reduction), so they
    # cannot contaminate valid lanes; they are zeroed out at the very end.
    m = jnp.max(x, axis=0, keepdims=True)                        # (1, TL)
    sh = x - m                                                   # (C, TL)
    lse = jnp.log(jnp.sum(jnp.exp(sh), axis=0, keepdims=True))   # (1, TL)

    # Gather the shifted logit at the target class via compare/select.
    cls = jax.lax.broadcasted_iota(jnp.int32, (c, tl), 0)
    sel = cls == t                                               # (C, TL)
    sh_t = jnp.sum(jnp.where(sel, sh, 0.0), axis=0, keepdims=True)

    logpt = sh_t - lse                                           # (1, TL)
    pt = jnp.exp(logpt)       # computed BEFORE alpha scaling (matches torch)

    if alpha is not None:
        if c <= 64:
            # alpha baked as constants: unrolled select chain on the (1, TL)
            # target row -- no (C, TL) broadcast, no extra sublane reduce.
            at = jnp.full((1, tl), alpha[0], dtype=jnp.float32)
            for k in range(1, c):
                at = jnp.where(t == k, jnp.float32(alpha[k]), at)
        else:
            # Larger C: reuse `sel` with a constant (C, 1) alpha column.
            a_const = jnp.asarray(alpha, dtype=jnp.float32).reshape(c, 1)
            at = jnp.sum(jnp.where(sel, a_const, 0.0), axis=0, keepdims=True)
        logpt = logpt * at

    # Focal modulation, specialized on gamma (avoids jnp.power for the common
    # integer-gamma case and the pt==1 / gamma==0 edge cases).
    if gamma == 0.0:
        loss = -logpt
    else:
        omp = 1.0 - pt
        if float(gamma).is_integer() and 1 <= int(gamma) <= 4:
            mod = omp
            for _ in range(int(gamma) - 1):
                mod = mod * omp
        else:
            mod = jnp.power(omp, gamma)
        loss = -mod * logpt

    if needs_mask:
        # Only emitted when TL does not divide L: ~3 VALU ops on a (1, TL)
        # vector per tile (negligible), a no-op select on interior tiles.
        off = (jp * num_inner + jj) * tl
        lane = jax.lax.broadcasted_iota(jnp.int32, (1, tl), 1) + off
        loss = jnp.where(lane < l_total, loss, 0.0)

    # Lane-wise vector accumulator.
    out_ref[0] = out_ref[0] + loss


def _per_generation_tuning():
    """Returns (logits-block target bytes, VMEM budget bytes for tile sizing)."""
    kind = ""
    try:
        kind = jax.devices()[0].device_kind.lower()
    except Exception:
        pass
    if "v7" in kind:
        # 64 MiB physical VMEM per TensorCore: ~4 MiB blocks, tight budget.
        return 4 * 1024 * 1024, 40 * 1024 * 1024
    if "v6" in kind or "v5" in kind:
        # 128 MiB VMEM, HBM-bound: bigger blocks amortize per-step overhead.
        return 8 * 1024 * 1024, 96 * 1024 * 1024
    return 4 * 1024 * 1024, 40 * 1024 * 1024


def focal_loss(x, target, gamma=0.0, alpha=None, size_average=True):
    """Pallas implementation of FocalLoss.forward (returns a scalar)."""
    # TODO(synk): the PyTorch NaN/Inf input prints and the loss NaN assert are
    # host-side runtime checks with no in-kernel equivalent; omitted.
    gamma = float(gamma)

    if x.ndim > 2:
        b, c = int(x.shape[0]), int(x.shape[1])
        l = 1
        for d in x.shape[2:]:
            l *= int(d)
        x3 = x.reshape(b, c, l)              # free view: NCHW -> (N, C, H*W)
    else:
        # TODO(synk): for C >= 128 a classes-on-lanes kernel variant would
        # avoid this full HBM->HBM transpose copy of the 2D logits.
        m2, c = int(x.shape[0]), int(x.shape[1])
        b, l = 1, m2
        x3 = x.T.reshape(1, c, l)

    # Narrow target dtype: the reshape/cast copy happens anyway; shrinking the
    # target stream 4 -> 2 bytes cuts HBM traffic noticeably for small C.
    tgt_dtype = jnp.int16 if c <= 32767 else jnp.int32
    tgt_bytes = 2 if tgt_dtype == jnp.int16 else 4
    t3 = target.reshape(b, 1, l).astype(tgt_dtype)

    # alpha handling, mirroring the module __init__, baked as trace-time
    # constants (alpha is fixed per module instance, so no HBM/SMEM traffic).
    if alpha is None:
        alpha_list = None
    elif isinstance(alpha, (float, int)) and not isinstance(alpha, bool):
        # Binary-alpha path (only meaningful for C == 2, like the torch gather).
        alpha_list = [float(alpha), 1.0 - float(alpha)]
    else:
        alpha_list = [float(v) for v in np.asarray(alpha).reshape(-1)]
    if alpha_list is not None:
        assert len(alpha_list) == c, "alpha must have one entry per class"

    # Lane-tile size: per-generation block target and a VMEM budget that also
    # accounts for the ~6 block-sized (C, TL) f32 intermediates the compiler
    # materializes; multiple of 128 lanes, capped by the padded spatial extent.
    blk_bytes, vmem_budget = _per_generation_tuning()
    l_pad = ((l + 127) // 128) * 128
    tl_from_blk = max(128, (blk_bytes // (4 * c)) // 128 * 128)
    per_lane_bytes = (2 + 6) * c * 4 + 2 * tgt_bytes + 2 * 4
    tl_from_vmem = max(128, (vmem_budget // per_lane_bytes) // 128 * 128)
    tl = min(tl_from_blk, tl_from_vmem, l_pad)
    num_j = -(-l // tl)
    needs_mask = (l % tl) != 0

    # Split the lane sweep into an outer *parallel* chunk so both v7x
    # TensorCores get work even when N is 1-2 (neutral on 1-TC chips).
    jp_count = 2 if (num_j >= 2 and num_j % 2 == 0) else 1
    num_inner = num_j // jp_count

    vmem_need = per_lane_bytes * tl
    vmem_limit = int(max(32 << 20,
                         min(vmem_budget + (8 << 20), vmem_need + (8 << 20))))

    kernel = functools.partial(
        _focal_kernel, gamma=gamma, alpha=alpha_list, tl=tl, l_total=l,
        num_inner=num_inner, needs_mask=needs_mask)

    out = pl.pallas_call(
        kernel,
        out_shape=jax.ShapeDtypeStruct((b * jp_count, 1, tl), jnp.float32),
        grid_spec=pltpu.PrefetchScalarGridSpec(
            num_scalar_prefetch=0,
            grid=(b, jp_count, num_inner),
            in_specs=[
                pl.BlockSpec((1, c, tl),                       # logits
                             lambda n, jp, jj: (n, 0, jp * num_inner + jj)),
                pl.BlockSpec((1, 1, tl),                       # targets
                             lambda n, jp, jj: (n, 0, jp * num_inner + jj)),
            ],
            out_specs=pl.BlockSpec((1, 1, tl),
                                   lambda n, jp, jj: (n * jp_count + jp, 0, 0)),
        ),
        compiler_params=pltpu.CompilerParams(
            dimension_semantics=("parallel", "parallel", "arbitrary"),
            vmem_limit_bytes=vmem_limit),
    )(x3, t3)

    total = jnp.sum(out)
    if size_average:
        return total / float(b * l)
    return total


def _focal_loss_ref(x, target, gamma, alpha, size_average):
    # pure-JAX reference for verification
    if x.ndim > 2:
        n, c = x.shape[0], x.shape[1]
        x2 = x.reshape(n, c, -1).transpose(0, 2, 1).reshape(-1, c)
    else:
        x2 = x
        c = x2.shape[-1]
    t = target.reshape(-1).astype(jnp.int32)
    logp = jax.nn.log_softmax(x2.astype(jnp.float32), axis=-1)
    logpt = jnp.take_along_axis(logp, t[:, None], axis=1)[:, 0]
    pt = jnp.exp(logpt)
    if alpha is not None:
        a = jnp.asarray(alpha, jnp.float32)
        logpt = logpt * a[t]
    loss = -jnp.power(1.0 - pt, gamma) * logpt
    return loss.mean() if size_average else loss.sum()


if __name__ == "__main__":
    key = jax.random.PRNGKey(0)
    k1, k2 = jax.random.split(key)

    N, C, H, W = 2, 4, 16, 16
    gamma = 2.0
    alpha = [0.25, 0.5, 0.15, 0.10]     # one weight per class, deterministic
    size_average = True

    x = jax.random.normal(k1, (N, C, H, W), dtype=jnp.float32)
    target = jax.random.randint(k2, (N, H, W), 0, C, dtype=jnp.int32)

    out = focal_loss(x, target, gamma=gamma, alpha=alpha,
                     size_average=size_average)
    out = jax.block_until_ready(out)

    ref = _focal_loss_ref(x, target, gamma, alpha, size_average)
    assert jnp.allclose(out, ref, rtol=1e-5, atol=1e-6), (out, ref)

    print("KERNEL_OK")
</pallas_src>

<mosaic_0001>
module attributes {stable_mosaic.version = 11 : i64} {
  func.func @_focal_kernel(%arg0: i32, %arg1: i32, %arg2: i32, %arg3: memref<1x4x256xf32, #tpu.memory_space<vmem>>, %arg4: memref<1x1x256xi16, #tpu.memory_space<vmem>>, %arg5: memref<1x1x256xf32, #tpu.memory_space<vmem>>) attributes {dimension_semantics = [#tpu.dimension_semantics<parallel>, #tpu.dimension_semantics<parallel>, #tpu.dimension_semantics<arbitrary>], iteration_bounds = array<i64: 2, 1, 1>, scalar_prefetch = 0 : i64, scratch_operands = 0 : i64, tpu.core_type = #tpu.core_type<tc>, window_params = [{transform_indices = @transform_0, window_bounds = array<i64: 1, 4, 256>}, {transform_indices = @transform_1, window_bounds = array<i64: 1, 1, 256>}, {transform_indices = @transform_2, window_bounds = array<i64: 1, 1, 256>}]} {
    %c0_i32 = arith.constant 0 : i32
    %0 = arith.cmpi eq, %arg2, %c0_i32 : i32
    %1 = arith.extui %0 : i1 to i32
    %c0_i32_0 = arith.constant 0 : i32
    %2 = arith.cmpi ne, %1, %c0_i32_0 : i32
    scf.if %2 {
      %cst_21 = arith.constant 0.000000e+00 : f32
      %51 = vector.broadcast %cst_21 : f32 to vector<1x1x256xf32>
      %c0_22 = arith.constant 0 : index
      %c0_23 = arith.constant 0 : index
      %c0_24 = arith.constant 0 : index
      %52 = vector.load %arg5[%c0_22, %c0_23, %c0_24] : memref<1x1x256xf32, #tpu.memory_space<vmem>>, vector<1x1x256xf32>
      tpu.vector_store %arg5[%c0_22, %c0_23, %c0_24], %51 {strides = array<i32>} : memref<1x1x256xf32, #tpu.memory_space<vmem>>, vector<1x1x256xf32>,
    } else {
    }
    %c0 = arith.constant 0 : index
    %c0_1 = arith.constant 0 : index
    %c0_2 = arith.constant 0 : index
    %3 = vector.load %arg3[%c0, %c0_1, %c0_2] : memref<1x4x256xf32, #tpu.memory_space<vmem>>, vector<1x4x256xf32>
    %4 = vector.shape_cast %3 : vector<1x4x256xf32> to vector<4x256xf32>
    %c0_3 = arith.constant 0 : index
    %c0_4 = arith.constant 0 : index
    %c0_5 = arith.constant 0 : index
    %5 = vector.load %arg4[%c0_3, %c0_4, %c0_5] : memref<1x1x256xi16, #tpu.memory_space<vmem>>, vector<1x1x256xi16>
    %6 = vector.shape_cast %5 : vector<1x1x256xi16> to vector<1x256xi16>
    %7 = arith.extsi %6 : vector<1x256xi16> to vector<1x256xi32>
    %cst = arith.constant dense<0xFF800000> : vector<256xf32>
    %8 = vector.multi_reduction <maximumf>, %4, %cst [0] : vector<4x256xf32> to vector<256xf32>
    %9 = vector.shape_cast %8 : vector<256xf32> to vector<1x256xf32>
    %10 = vector.broadcast %9 : vector<1x256xf32> to vector<4x256xf32>
    %11 = arith.subf %4, %10 : vector<4x256xf32>
    %12 = math.exp %11 : vector<4x256xf32>
    %cst_6 = arith.constant dense<0.000000e+00> : vector<256xf32>
    %13 = vector.multi_reduction <add>, %12, %cst_6 [0] : vector<4x256xf32> to vector<256xf32>
    %14 = vector.shape_cast %13 : vector<256xf32> to vector<1x256xf32>
    %15 = math.log %14 : vector<1x256xf32>
    %16 = tpu.iota {dimensions = array<i32: 0>} : vector<4x256xi32>
    %17 = vector.broadcast %7 : vector<1x256xi32> to vector<4x256xi32>
    %18 = arith.cmpi eq, %16, %17 : vector<4x256xi32>
    %cst_7 = arith.constant 0.000000e+00 : f32
    %19 = vector.broadcast %cst_7 : f32 to vector<4x256xf32>
    %20 = arith.select %18, %11, %19 : vector<4x256xi1>, vector<4x256xf32>
    %cst_8 = arith.constant dense<0.000000e+00> : vector<256xf32>
    %21 = vector.multi_reduction <add>, %20, %cst_8 [0] : vector<4x256xf32> to vector<256xf32>
    %22 = vector.shape_cast %21 : vector<256xf32> to vector<1x256xf32>
    %23 = arith.subf %22, %15 : vector<1x256xf32>
    %24 = math.exp %23 : vector<1x256xf32>
    %cst_9 = arith.constant 2.500000e-01 : f32
    %25 = vector.broadcast %cst_9 : f32 to vector<1x256xf32>
    %c1_i32 = arith.constant 1 : i32
    %26 = vector.broadcast %c1_i32 : i32 to vector<1x256xi32>
    %27 = arith.cmpi eq, %7, %26 : vector<1x256xi32>
    %cst_10 = arith.constant 5.000000e-01 : f32
    %28 = vector.broadcast %cst_10 : f32 to vector<1x256xf32>
    %29 = arith.select %27, %28, %25 : vector<1x256xi1>, vector<1x256xf32>
    %c2_i32 = arith.constant 2 : i32
    %30 = vector.broadcast %c2_i32 : i32 to vector<1x256xi32>
    %31 = arith.cmpi eq, %7, %30 : vector<1x256xi32>
    %cst_11 = arith.constant 1.500000e-01 : f32
    %32 = vector.broadcast %cst_11 : f32 to vector<1x256xf32>
    %33 = arith.select %31, %32, %29 : vector<1x256xi1>, vector<1x256xf32>
    %c3_i32 = arith.constant 3 : i32
    %34 = vector.broadcast %c3_i32 : i32 to vector<1x256xi32>
    %35 = arith.cmpi eq, %7, %34 : vector<1x256xi32>
    %cst_12 = arith.constant 1.000000e-01 : f32
    %36 = vector.broadcast %cst_12 : f32 to vector<1x256xf32>
    %37 = arith.select %35, %36, %33 : vector<1x256xi1>, vector<1x256xf32>
    %38 = arith.mulf %23, %37 : vector<1x256xf32>
    %cst_13 = arith.constant 1.000000e+00 : f32
    %39 = vector.broadcast %cst_13 : f32 to vector<1x256xf32>
    %40 = arith.subf %39, %24 : vector<1x256xf32>
    %41 = arith.mulf %40, %40 : vector<1x256xf32>
    %cst_14 = arith.constant 0.000000e+00 : f32
    %42 = vector.broadcast %cst_14 : f32 to vector<1x256xf32>
    %43 = arith.subf %42, %41 : vector<1x256xf32>
    %44 = arith.mulf %43, %38 : vector<1x256xf32>
    %c0_15 = arith.constant 0 : index
    %c0_16 = arith.constant 0 : index
    %c0_17 = arith.constant 0 : index
    %45 = vector.load %arg5[%c0_15, %c0_16, %c0_17] : memref<1x1x256xf32, #tpu.memory_space<vmem>>, vector<1x1x256xf32>
    %46 = vector.shape_cast %45 : vector<1x1x256xf32> to vector<1x256xf32>
    %47 = arith.addf %46, %44 : vector<1x256xf32>
    %c0_18 = arith.constant 0 : index
    %c0_19 = arith.constant 0 : index
    %c0_20 = arith.constant 0 : index
    %48 = vector.load %arg5[%c0_18, %c0_19, %c0_20] : memref<1x1x256xf32, #tpu.memory_space<vmem>>, vector<1x1x256xf32>
    %49 = vector.shape_cast %48 : vector<1x1x256xf32> to vector<1x256xf32>
    %50 = vector.shape_cast %47 : vector<1x256xf32> to vector<1x1x256xf32>
    tpu.vector_store %arg5[%c0_18, %c0_19, %c0_20], %50 {strides = array<i32>} : memref<1x1x256xf32, #tpu.memory_space<vmem>>, vector<1x1x256xf32>,
    return
  }
  func.func @transform_0(%arg0: i32, %arg1: i32, %arg2: i32) -> (i32, i32, i32) {
    %c1_i32 = arith.constant 1 : i32
    %0 = arith.muli %arg1, %c1_i32 : i32
    %1 = arith.addi %0, %arg2 : i32
    %c0_i32 = arith.constant 0 : i32
    %c0_i32_0 = arith.constant 0 : i32
    return %arg0, %c0_i32, %1 : i32, i32, i32
  }
  func.func @transform_1(%arg0: i32, %arg1: i32, %arg2: i32) -> (i32, i32, i32) {
    %c1_i32 = arith.constant 1 : i32
    %0 = arith.muli %arg1, %c1_i32 : i32
    %1 = arith.addi %0, %arg2 : i32
    %c0_i32 = arith.constant 0 : i32
    %c0_i32_0 = arith.constant 0 : i32
    return %arg0, %c0_i32, %1 : i32, i32, i32
  }
  func.func @transform_2(%arg0: i32, %arg1: i32, %arg2: i32) -> (i32, i32, i32) {
    %c1_i32 = arith.constant 1 : i32
    %0 = arith.muli %arg0, %c1_i32 : i32
    %1 = arith.addi %0, %arg1 : i32
    %c0_i32 = arith.constant 0 : i32
    %c0_i32_0 = arith.constant 0 : i32
    %c0_i32_1 = arith.constant 0 : i32
    return %1, %c0_i32, %c0_i32_0 : i32, i32, i32
  }
}

</mosaic_0001>

<llo_original>
// kernel: tpu_custom_call.1
$region0: #{tpu_custom_call.1}
  #allocation0 [shape = 'u32[]', space=smem, size = 0x4, offset = 0x4, fixed_abs, tag = 'smem constant byte address 0x4 - core index']
  #allocation1 [shape = 'u32[144,128]{1,0:T(1,128)}', space=vmem, size = 0x12000, scoped, tag = 'internal scratch']
  %s0 = inlined_call_operand.hbm [shape: f32[2,4,256], index: 0, kind: input, shape index: {}]
  %s1 = inlined_call_operand.vmem [shape: s16[2,1,256], index: 1, kind: input, shape index: {}]
  %s2 = inlined_call_operand.hbm [shape: f32[2,1,256], index: 2, kind: output, shape index: {}]
  %s3 = sld [smem:[#allocation0]]
  $region49: #{tpu_custom_call.1} parent=0
    _
  %s5 = ssub.s32 1, %s3
  %s6 = scalar_select 0, %s5, %s3
  $region1: #{tpu_custom_call.1} parent=0
    #allocation2 [shape = 'u8[8192]{0}', space=vmem, size = 0x2000, scoped, tag = 'input window, operand 0']
    #allocation3 [shape = 's32[2]{0}', space=sflag, size = 0x8, scoped, tag = 'scoped memory for tpu_custom_call.1']
    #allocation4 [shape = 's32[2]{0}', space=sflag, size = 0x8, scoped, tag = 'scoped memory for tpu_custom_call.1']
    #allocation5 [shape = 'u8[2048]{0}', space=vmem, size = 0x800, scoped, tag = 'output window, operand 0']
    %7 = vsyncpa [#allocation3], 0
    %s8 = scalar_lea.sflag [#allocation3], 1
    %9 = vsyncpa %s8, 0
    %10 = vsyncpa [#allocation4], 0
    %s11 = scalar_lea.sflag [#allocation4], 1
    %12 = vsyncpa %s11, 0
    loop: start=0, step=1, limit=4
    $region2: #{tpu_custom_call.1} parent=1 // loop_pre_header
      _
    $region3: #{tpu_custom_call.1} parent=1 // loop_header
      %s14 = sphi 0, %s18
      %p15 = scmp.ge.s32.totalorder %s14, 4
      %s21 = sphi 0, %s40
      %s22 = sphi 0, %s36
      %s23 = sphi 0, %s32
      %s24 = sphi 0, %s21
      %s25 = sphi 0, %s22
      %s26 = sphi 0, %s23
      %s27 = sphi 0, %s24
      %s28 = sphi 0, %s25
      %s29 = sphi 0, %s26
      %s47 = sphi 0, %s49
      %s50 = sphi 0, %s47
      %s51 = sphi 0, %s50
      %s67 = sphi 0, %s51
      %s77 = sphi 0, %s79
      %s80 = sphi 0, %s77
      %s81 = sphi 0, %s80
      %s97 = sphi 0, %s81
      %s105 = sphi 0, %s107
      %s108 = sphi 0, %s105
      %s109 = sphi 0, %s108
      %s125 = sphi 0, %s109
    $region4: #{tpu_custom_call.1} parent=1 // loop_header_branch
      %17 = sbr.rel (%p15) target = $region8
    $region5: #{tpu_custom_call.1} parent=1 // loop_body
      %s19 = ssub.s32 %s14, 1
      %s20 = ssub.s32 %s14, 2
      %s30 = sadd.s32 1, %s23
      %p31 = scmp.ge.s32.totalorder %s30, 1
      %s32 = scalar_select %p31, 0, %s30
      %s33 = sadd.s32 1, %s22
      %s34 = scalar_select %p31, %s33, %s22
      %p35 = scmp.ge.s32.totalorder %s34, 1
      %s36 = scalar_select %p35, 0, %s34
      %s37 = sadd.s32 1, %s21
      %s38 = scalar_select %p35, %s37, %s21
      %p39 = scmp.ge.s32.totalorder %s38, 2
      %s40 = scalar_select %p39, 0, %s38
      %s41 = sadd.s32 %s22, %s23
      %s42 = sadd.s32 %s36, %s32
      %s43 = ssub.s32 %s21, %s40
      %s44 = ssub.s32 %s41, %s42
      %s45 = sor.u32 %s43, %s44
      %p46 = scmp.eq.s32.totalorder %s45, 0
      %s48 = sadd.s32 %s47, 1
      %s49 = scalar_select %p46, %s47, %s48
      %p52 = pneg %p46
      %p53 = scmp.eq.s32.totalorder %s14, 1
      %p54 = por %p52, %p53
      %p55 = scmp.ne.s32.totalorder %s47, %s50
      %p56 = scmp.eq.s32.totalorder %s14, 0
      %p57 = por %p55, %p56
      %p58 = scmp.ne.s32.totalorder %s47, %s50
      %p59 = scmp.eq.s32.totalorder %s19, 1
      %p60 = por %p58, %p59
      %p61 = scmp.ne.s32.totalorder %s50, %s51
      %p62 = scmp.eq.s32.totalorder %s19, 0
      %p63 = por %p61, %p62
      %p64 = scmp.ne.s32.totalorder %s50, %s51
      %p65 = scmp.eq.s32.totalorder %s20, 1
      %p66 = por %p64, %p65
      %p68 = scmp.ne.s32.totalorder %s51, %s67
      %p69 = scmp.eq.s32.totalorder %s20, 0
      %p70 = por %p68, %p69
      %s71 = sadd.s32 %s22, %s23
      %s72 = sadd.s32 %s36, %s32
      %s73 = ssub.s32 %s21, %s40
      %s74 = ssub.s32 %s71, %s72
      %s75 = sor.u32 %s73, %s74
      %p76 = scmp.eq.s32.totalorder %s75, 0
      %s78 = sadd.s32 %s77, 1
      %s79 = scalar_select %p76, %s77, %s78
      %p82 = pneg %p76
      %p83 = scmp.eq.s32.totalorder %s14, 1
      %p84 = por %p82, %p83
      %p85 = scmp.ne.s32.totalorder %s77, %s80
      %p86 = scmp.eq.s32.totalorder %s14, 0
      %p87 = por %p85, %p86
      %p88 = scmp.ne.s32.totalorder %s77, %s80
      %p89 = scmp.eq.s32.totalorder %s19, 1
      %p90 = por %p88, %p89
      %p91 = scmp.ne.s32.totalorder %s80, %s81
      %p92 = scmp.eq.s32.totalorder %s19, 0
      %p93 = por %p91, %p92
      %p94 = scmp.ne.s32.totalorder %s80, %s81
      %p95 = scmp.eq.s32.totalorder %s20, 1
      %p96 = por %p94, %p95
      %p98 = scmp.ne.s32.totalorder %s81, %s97
      %p99 = scmp.eq.s32.totalorder %s20, 0
      %p100 = por %p98, %p99
      %s101 = sadd.s32 %s21, %s22
      %s102 = sadd.s32 %s40, %s36
      %s103 = ssub.s32 %s101, %s102
      %p104 = scmp.eq.s32.totalorder %s103, 0
      %s106 = sadd.s32 %s105, 1
      %s107 = scalar_select %p104, %s105, %s106
      %p110 = pneg %p104
      %p111 = scmp.eq.s32.totalorder %s14, 1
      %p112 = por %p110, %p111
      %p113 = scmp.ne.s32.totalorder %s105, %s108
      %p114 = scmp.eq.s32.totalorder %s14, 0
      %p115 = por %p113, %p114
      %p116 = scmp.ne.s32.totalorder %s105, %s108
      %p117 = scmp.eq.s32.totalorder %s19, 1
      %p118 = por %p116, %p117
      %p119 = scmp.ne.s32.totalorder %s108, %s109
      %p120 = scmp.eq.s32.totalorder %s19, 0
      %p121 = por %p119, %p120
      %p122 = scmp.ne.s32.totalorder %s108, %s109
      %p123 = scmp.eq.s32.totalorder %s20, 1
      %p124 = por %p122, %p123
      %p126 = scmp.ne.s32.totalorder %s109, %s125
      %p127 = scmp.eq.s32.totalorder %s20, 0
      %p128 = por %p126, %p127
      %p129 = scmp.le.s32.totalorder 1, %s14
      %p130 = scmp.lt.s32.totalorder %s14, 3
      %p131 = pnand %p129, %p130
      %p132 = pneg %p131
      // Predicated region
      $region9: #{tpu_custom_call.1} parent=5 // pred_check
        _
      $region10: #{tpu_custom_call.1} parent=5 // pred_check_branch
        %134 = sbr.rel (%p131) target = $region12
      $region11: #{tpu_custom_call.1} parent=5 // pred_region
        %s135 = ssub.s32 %s14, 1
      $region12: #{tpu_custom_call.1} parent=5 // pred_fallthru
        _
      %p136 = scmp.lt.s32.totalorder %s14, 2
      // Predicated region
      $region13: #{tpu_custom_call.1} parent=5 // pred_check
        %p137 = pneg %p136
      $region14: #{tpu_custom_call.1} parent=5 // pred_check_branch
        %139 = sbr.rel (%p137) target = $region16
      $region15: #{tpu_custom_call.1} parent=5 // pred_region
        // Predicated region
        $region17: #{tpu_custom_call.1} parent=15 // pred_check
          %p140 = pneg %p57
        $region18: #{tpu_custom_call.1} parent=15 // pred_check_branch
          %142 = sbr.rel (%p140) target = $region20
        $region19: #{tpu_custom_call.1} parent=15 // pred_region
          %s143 = sand.u32 %s47, 1
          %s144 = scalar_lea.sflag [#allocation3], %s143
          %s145 = sand.u32 %s47, 1
          %s146 = smul.addr %s145, 8
          %s147 = scalar_lea.vmem [#allocation2], %s146
          %s148 = sadd.s32 %s22, %s23
          %s149 = smul.u32 2, %s148
          %s151 = ssub.s32 128, 128
          %152 = vsyncadd %s144, %s151
          %s153 = smul.addr %s21, 2
          %s154 = sadd.s32 %s149, %s153
          %s155 = smul.addr %s154, 64
          %s156 = scalar_lea.hbm %s0, %s155
          %s158 = sshll.u32 %s147, 4
          %s159 = int_to_ptr.vmem [resolvable:$true] %s158
          %161 = dma.hbm_to_vmem [thread:$0]  %s156, 128, %s159, %s144
        $region20: #{tpu_custom_call.1} parent=15 // pred_fallthru
          _
        // Predicated region
        $region21: #{tpu_custom_call.1} parent=15 // pred_check
          %p162 = pneg %p87
        $region22: #{tpu_custom_call.1} parent=15 // pred_check_branch
          %164 = sbr.rel (%p162) target = $region24
        $region23: #{tpu_custom_call.1} parent=15 // pred_region
          %s165 = sadd.s32 %s22, %s23
          %s166 = smul.u32 2, %s165
          %p167 = scmp.lt.s32.totalorder %s21, 1
          %s168 = scalar_select %p167, %s21, 1
          %p169 = scmp.lt.s32.totalorder %s166, 1
          %s170 = scalar_select %p169, %s166, 1
          %s171 = smul.addr %s168, 2
          %s172 = sadd.s32 %s170, %s171
          %s173 = scalar_lea.vmem %s1, %s172
          %s174 = sadd.s32 %s22, %s23
          %s175 = smul.u32 2, %s174
        $region24: #{tpu_custom_call.1} parent=15 // pred_fallthru
          _
      $region16: #{tpu_custom_call.1} parent=5 // pred_fallthru
        _
      %p176 = scmp.le.s32.totalorder 1, %s14
      %p177 = scmp.lt.s32.totalorder %s14, 3
      %p178 = pnand %p176, %p177
      %p179 = pneg %p178
      // Predicated region
      $region25: #{tpu_custom_call.1} parent=5 // pred_check
        _
      $region26: #{tpu_custom_call.1} parent=5 // pred_check_branch
        %181 = sbr.rel (%p178) target = $region28
      $region27: #{tpu_custom_call.1} parent=5 // pred_region
        %s182 = ssub.s32 %s14, 1
        %s183 = sand.u32 %s50, 1
        %s184 = scalar_lea.sflag [#allocation3], %s183
        %s185 = sand.u32 %s50, 1
        %s186 = smul.addr %s185, 8
        %s187 = scalar_lea.vmem [#allocation2], %s186
        // Predicated region
        $region29: #{tpu_custom_call.1} parent=27 // pred_check
          %p188 = pneg %p63
        $region30: #{tpu_custom_call.1} parent=27 // pred_check_branch
          %190 = sbr.rel (%p188) target = $region32
        $region31: #{tpu_custom_call.1} parent=27 // pred_region
          %191 = dma.done %s184, 128
        $region32: #{tpu_custom_call.1} parent=27 // pred_fallthru
          _
        %s192 = sand.u32 %s50, 1
        %s193 = scalar_lea.sflag [#allocation3], %s192
        %s194 = sand.u32 %s50, 1
        %s195 = smul.addr %s194, 8
        %s196 = scalar_lea.vmem [#allocation2], %s195
        %p197 = pneg %p63
        %p198 = pneg %p60
        %s199 = sadd.s32 %s25, %s26
        %s200 = smul.u32 2, %s199
        %p201 = scmp.lt.s32.totalorder %s24, 1
        %s202 = scalar_select %p201, %s24, 1
        %p203 = scmp.lt.s32.totalorder %s200, 1
        %s204 = scalar_select %p203, %s200, 1
        %s205 = smul.addr %s202, 2
        %s206 = sadd.s32 %s204, %s205
        %s207 = scalar_lea.vmem %s1, %s206
        %p208 = pneg %p93
        %p209 = pneg %p90
        %p210 = pneg %p121
        %p211 = pneg %p118
        %s212 = sand.u32 %s108, 1
        %s213 = scalar_lea.sflag [#allocation4], %s212
        %s214 = sand.u32 %s108, 1
        %s215 = smul.addr %s214, 2
        %s216 = scalar_lea.vmem [#allocation5], %s215
        %s217 = sadd.s32 %s25, %s26
        %s218 = smul.u32 2, %s217
        %s219 = sadd.s32 %s25, %s26
        %s220 = smul.u32 2, %s219
        %p221 = scmp.lt.s32.totalorder %s24, 1
        %s222 = scalar_select %p221, %s24, 1
        %p223 = scmp.lt.s32.totalorder %s220, 1
        %s224 = scalar_select %p223, %s220, 1
        %s225 = smul.addr %s222, 2
        %s226 = sadd.s32 %s224, %s225
        %s227 = scalar_lea.vmem %s1, %s226
        %s228 = sadd.s32 %s25, %s26
        %s229 = smul.u32 2, %s228
        %s230 = sadd.s32 %s24, %s25
        %p231 = scmp.eq.s32.totalorder %s26, 0
        // Predicated region
        $region33: #{tpu_custom_call.1} parent=27 // pred_check
          %p232 = pneg %p231
        $region34: #{tpu_custom_call.1} parent=27 // pred_check_branch
          %234 = sbr.rel (%p232) target = $region36
        $region35: #{tpu_custom_call.1} parent=27 // pred_region
          %v235 = vlaneseq
          %vm236 = vcmp.ge.s32.totalorder %v235, 0
          %vm237 = vcmp.lt.s32.totalorder %v235, 256
          %vm238 = vmand %vm236, %vm237
          %239 = vst.msk [vmem:[%s216] sm:$0x3] %vm238, 0.0
        $region36: #{tpu_custom_call.1} parent=27 // pred_fallthru
          _
        %v240 = vld [vmem:[%s187] sm:$0xff]
        %v241 = vld [vmem:[%s227] sm:$0x3]
        %v242 = vunpack.c.l.b16 %v241
        %v244 = vcombine.high %v240, %v240
        %vm246 = vcmask 1043456
        %v247 = vsel %vm246, %v240, -inf
        %v248 = vrot.slane %v247, 4
        %v249 = vmax.f32 %v247, %v248
        %v250 = vrot.slane %v249, 2
        %v251 = vmax.f32 %v249, %v250
        %v252 = vrot.slane %v251, 1
        %v253 = vmax.f32 %v251, %v252
        %v254 = vsel %vm246, %v244, -inf
        %v255 = vrot.slane %v254, 4
        %v256 = vmax.f32 %v254, %v255
        %v257 = vrot.slane %v256, 2
        %v258 = vmax.f32 %v256, %v257
        %v259 = vrot.slane %v258, 1
        %v260 = vmax.f32 %v258, %v259
        %v263 = vcombine.low %v253, %v260
        %v265 = vsub.f32 %v240, %v263
        %v266 = vmul.f32 %v265, 1.442695
        %v267 = vpow.pop %v266
        %v269 = vcombine.high %v267, %v267
        %v271 = vsel %vm246, %v267, 0.0
        %v272 = vrot.slane %v271, 4
        %v273 = vadd.f32 %v271, %v272
        %v274 = vrot.slane %v273, 2
        %v275 = vadd.f32 %v273, %v274
        %v276 = vrot.slane %v275, 1
        %v277 = vadd.f32 %v275, %v276
        %v278 = vsel %vm246, %v269, 0.0
        %v279 = vrot.slane %v278, 4
        %v280 = vadd.f32 %v278, %v279
        %v281 = vrot.slane %v280, 2
        %v282 = vadd.f32 %v280, %v281
        %v283 = vrot.slane %v282, 1
        %v284 = vadd.f32 %v282, %v283
        %v285 = vlog2.pop %v277
        %v286 = vmul.f32 %v285, 0.6931472
        %v287 = vlog2.pop %v284
        %v288 = vmul.f32 %v287, 0.6931472
        %v289 = vlaneseq
        %v290 = vshrl.u32 %v289, 7
        %v291 = vlaneseq
        %v292 = vshrl.u32 %v291, 7
        %v293 = vsub.s32 0, %v292
        %v294 = vrot.slane %v242, %v293
        %v295 = vlaneseq
        %v296 = vshrl.u32 %v295, 7
        %v297 = vsub.s32 2, %v296
        %v298 = vrot.slane %v242, %v297
        %v299 = vlaneseq
        %v300 = vshrl.u32 %v299, 7
        %v301 = vsub.s32 0, %v300
        %v302 = vrot.slane %v294, %v301
        %v303 = vlaneseq
        %v304 = vshrl.u32 %v303, 7
        %v305 = vsub.s32 0, %v304
        %v306 = vrot.slane %v298, %v305
        %vm307 = vcmp.eq.s32.totalorder %v290, %v302
        %vm308 = vcmp.eq.s32.totalorder %v290, %v306
        %v310 = vcombine.high %v265, %v265
        %v312 = vsel %vm307, %v265, 0.0
        %v313 = vsel %vm308, %v310, 0.0
        %v314 = vsel %vm246, %v312, 0.0
        %v315 = vrot.slane %v314, 4
        %v316 = vadd.f32 %v314, %v315
        %v317 = vrot.slane %v316, 2
        %v318 = vadd.f32 %v316, %v317
        %v319 = vrot.slane %v318, 1
        %v320 = vadd.f32 %v318, %v319
        %v321 = vsel %vm246, %v313, 0.0
        %v322 = vrot.slane %v321, 4
        %v323 = vadd.f32 %v321, %v322
        %v324 = vrot.slane %v323, 2
        %v325 = vadd.f32 %v323, %v324
        %v326 = vrot.slane %v325, 1
        %v327 = vadd.f32 %v325, %v326
        %v328 = vsub.f32 %v320, %v286
        %v329 = vsub.f32 %v327, %v288
        %v330 = vmul.f32 %v328, 1.442695
        %v331 = vpow.pop %v330
        %v332 = vmul.f32 %v329, 1.442695
        %v333 = vpow.pop %v332
        %vm334 = vcmp.eq.s32.totalorder %v242, 1
        %v335 = vsel %vm334, 0.5, 0.25
        %vm336 = vcmp.eq.s32.totalorder %v242, 2
        %v337 = vsel %vm336, 0.15, %v335
        %vm338 = vcmp.eq.s32.totalorder %v242, 3
        %v339 = vsel %vm338, 0.1, %v337
        %v341 = vlaneseq
        %v342 = vshrl.u32 %v341, 7
        %v343 = vsub.s32 0, %v342
        %v344 = vrot.slane %v339, %v343
        %v345 = vlaneseq
        %v346 = vshrl.u32 %v345, 7
        %v347 = vsub.s32 2, %v346
        %v348 = vrot.slane %v339, %v347
        %v351 = vmul.f32 %v328, %v344
        %v352 = vmul.f32 %v329, %v348
        %v353 = vsub.f32 1.0, %v331
        %v354 = vsub.f32 1.0, %v333
        %v355 = vmul.f32 %v353, %v353
        %v356 = vmul.f32 %v354, %v354
        %v357 = vsub.f32 0.0, %v355
        %v358 = vsub.f32 0.0, %v356
        %v359 = vmul.f32 %v357, %v351
        %v360 = vmul.f32 %v358, %v352
        %v361 = vld [vmem:[%s216] sm:$0x3]
        %v364 = vcombine.low %v359, %v360
        %v366 = vunpack.c.l.s4 1966171168
        %v367 = vunpack.c.0.s8 %v366
        %v368 = vlaneseq
        %v369 = vshrl.u32 %v368, 7
        %v370 = vsub.s32 %v367, %v369
        %v371 = vrot.slane %v364, %v370
        %v373 = vunpack.c.l.s4 1966171168
        %v374 = vunpack.c.0.s8 %v373
        %v375 = vlaneseq
        %v376 = vshrl.u32 %v375, 7
        %v377 = vsub.s32 %v374, %v376
        %v378 = vrot.slane %v371, %v377
        %v380 = vadd.f32 %v361, %v378
        %v381 = vlaneseq
        %vm382 = vcmp.ge.s32.totalorder %v381, 0
        %vm383 = vcmp.lt.s32.totalorder %v381, 256
        %vm384 = vmand %vm382, %vm383
        %385 = vst.msk [vmem:[%s216] sm:$0x3] %vm384, %v380
        %s386 = sand.u32 %s108, 1
        %s387 = scalar_lea.sflag [#allocation4], %s386
        %s388 = sand.u32 %s108, 1
        %s389 = smul.addr %s388, 2
        %s390 = scalar_lea.vmem [#allocation5], %s389
        // Predicated region
        $region37: #{tpu_custom_call.1} parent=27 // pred_check
          %p391 = pneg %p118
        $region38: #{tpu_custom_call.1} parent=27 // pred_check_branch
          %393 = sbr.rel (%p391) target = $region40
        $region39: #{tpu_custom_call.1} parent=27 // pred_region
          %s394 = sadd.s32 %s24, %s25
          %s396 = ssub.s32 32, 32
          %397 = vsyncadd %s387, %s396
          %s398 = smul.addr %s394, 2
          %s399 = smul.addr %s398, 16
          %s400 = scalar_lea.hbm %s2, %s399
          %s402 = sshll.u32 %s390, 4
          %s403 = int_to_ptr.vmem [resolvable:$true] %s402
          %405 = dma.vmem_to_hbm [thread:$0]  %s403, 32, %s400, %s387
        $region40: #{tpu_custom_call.1} parent=27 // pred_fallthru
          _
      $region28: #{tpu_custom_call.1} parent=5 // pred_fallthru
        _
      %p406 = scmp.le.s32.totalorder 2, %s14
      // Predicated region
      $region41: #{tpu_custom_call.1} parent=5 // pred_check
        %p407 = pneg %p406
      $region42: #{tpu_custom_call.1} parent=5 // pred_check_branch
        %409 = sbr.rel (%p407) target = $region44
      $region43: #{tpu_custom_call.1} parent=5 // pred_region
        %s410 = ssub.s32 %s14, 2
        // Predicated region
        $region45: #{tpu_custom_call.1} parent=43 // pred_check
          %p411 = pneg %p124
        $region46: #{tpu_custom_call.1} parent=43 // pred_check_branch
          %413 = sbr.rel (%p411) target = $region48
        $region47: #{tpu_custom_call.1} parent=43 // pred_region
          %s414 = sand.u32 %s109, 1
          %s415 = scalar_lea.sflag [#allocation4], %s414
          %s416 = sand.u32 %s109, 1
          %s417 = smul.addr %s416, 2
          %s418 = scalar_lea.vmem [#allocation5], %s417
          %419 = dma.done %s415, 32
        $region48: #{tpu_custom_call.1} parent=43 // pred_fallthru
          _
      $region44: #{tpu_custom_call.1} parent=5 // pred_fallthru
        _
    $region6: #{tpu_custom_call.1} parent=1 // loop_footer
      %s18 = sadd.s32 1, %s14
    $region7: #{tpu_custom_call.1} parent=1 // loop_footer_branch
      %13 = sbr.rel target = $region3
    $region8: #{tpu_custom_call.1} parent=1 // loop_exit
      _
    %420 = vsyncpa [#allocation3], 1
    %s421 = scalar_lea.sflag [#allocation3], 1
    %422 = vsyncpa %s421, 1
    %423 = vsyncpa [#allocation4], 1
    %s424 = scalar_lea.sflag [#allocation4], 1
    %425 = vsyncpa %s424, 1

</llo_original>
